<compile_context>
chip_gen: v7x
topology: tpu7x:2x2x1
jax: 0.10.0
libtpu: 0.0.40
codegen_flags: <defaults>
</compile_context>

<pallas_src>
import functools

import jax
import jax.numpy as jnp
from jax.experimental import pallas as pl
from jax.experimental.pallas import tpu as pltpu


def _span_conv_kernel(x_ref, halo_ref, w_ref, b_ref, o_ref, *, max_width):
    # x_ref:    (1, TL, D)  current sequence tile (f32)
    # halo_ref: (1, H,  D)  next H >= max_width-1 rows (zeros past L)
    # w_ref:    (D, D)      linear weight, pre-transposed (in -> out), bf16
    # b_ref:    (1, D)      linear bias, f32
    # o_ref:    (1, TL, max_width*D)  lane-dense output block
    x = x_ref[0]                                   # (TL, D)
    halo = halo_ref[0]                             # (H, D)
    tl, d = x.shape

    # one contiguous view of the tile plus its right halo (halo is zero past L,
    # matching F.pad(x, (0, k-1)) + AvgPool1d(count_include_pad=True))
    xp = jnp.concatenate([x, halo], axis=0)        # (TL + H, D)

    w_bf = w_ref[...]                              # bf16 (D, D)
    bias_b = jnp.broadcast_to(b_ref[...], (tl, d)) # hoisted broadcast, f32

    outs = []
    running = x                                    # f32 sliding sum (width 1)
    for w in range(1, max_width + 1):
        if w > 1:
            running = running + xp[w - 1:w - 1 + tl, :]
            rep = running * jnp.asarray(1.0 / w, running.dtype)   # conv_mean
        else:
            rep = running                                          # identity rep
        h = jnp.maximum(rep, 0.0).astype(jnp.bfloat16)             # ReLU -> MXU
        y = jnp.dot(h, w_bf, preferred_element_type=jnp.float32) + bias_b
        outs.append(y)

    # single lane-dense, unmasked store of the whole tile's output
    o_ref[0] = jnp.concatenate(outs, axis=-1).astype(o_ref.dtype)


def span_conv_forward(x, w_lin, b_lin, max_width, *, tl=None, out_dtype=jnp.float32):
    """SpanConv (conv_mean) forward.

    x: (B, L, D) f32; w_lin: (D, D) PyTorch Linear weight (out, in); b_lin: (D,)
    returns (B, L, max_width, D)
    """
    B, L, D = x.shape
    pad = max_width - 1
    # halo rows: >= pad, multiple of 8 (sublane granularity), at least 8
    H = 8 * max(1, -(-pad // 8))

    # sequence tile: multiple of 8 and of H (so the halo index_map is exact)
    if tl is None:
        tl = 256
    tl = max(H, 8 * (-(-min(tl, L) // 8)))
    tl = H * (-(-tl // H))

    num_tiles = -(-L // tl)
    l_pad = num_tiles * tl

    # zero-pad once in the wrapper: L up to a tile multiple + H halo rows.
    xp = jnp.pad(x, ((0, 0), (0, l_pad + H - L), (0, 0)))

    w_t = jnp.transpose(w_lin).astype(jnp.bfloat16)   # (in, out): y = h @ w_t
    b2 = b_lin.reshape(1, D).astype(jnp.float32)

    r = tl // H
    kernel = functools.partial(_span_conv_kernel, max_width=max_width)
    out = pl.pallas_call(
        kernel,
        out_shape=jax.ShapeDtypeStruct((B, l_pad, max_width * D), out_dtype),
        grid_spec=pltpu.PrefetchScalarGridSpec(
            num_scalar_prefetch=0,
            grid=(B, num_tiles),
            in_specs=[
                pl.BlockSpec((1, tl, D), lambda b, l: (b, l, 0)),            # tile
                pl.BlockSpec((1, H, D), lambda b, l: (b, (l + 1) * r, 0)),   # halo
                pl.BlockSpec((D, D), lambda b, l: (0, 0)),                   # weight
                pl.BlockSpec((1, D), lambda b, l: (0, 0)),                   # bias
            ],
            out_specs=pl.BlockSpec((1, tl, max_width * D), lambda b, l: (b, l, 0)),
        ),
        compiler_params=pltpu.CompilerParams(
            dimension_semantics=("parallel", "parallel"),
            vmem_limit_bytes=32 * 1024 * 1024,
        ),
    )(xp, xp, w_t, b2)

    # slice off L padding; reshape (free) to the module's (B, L, max_width, D)
    return out[:, :L, :].reshape(B, L, max_width, D)


def span_conv_reference(x, w_lin, b_lin, max_width):
    """Pure-JAX f32 reference mirroring the PyTorch module (conv_mean)."""
    B, L, D = x.shape
    pad = max_width - 1
    xp = jnp.concatenate([x, jnp.zeros((B, pad, D), x.dtype)], axis=1)
    reps = [x]
    for k in range(2, max_width + 1):
        windows = jnp.stack([xp[:, j:j + L, :] for j in range(k)], axis=0)
        reps.append(jnp.mean(windows, axis=0))
    spans = jnp.stack(reps, axis=-2)                    # (B, L, max_width, D)
    h = jnp.maximum(spans, 0.0)
    return jnp.einsum('blwd,ed->blwe', h, w_lin) + b_lin


if __name__ == "__main__":
    B, L, D = 2, 20, 32
    max_width = 4   # conv kernels 2, 3, 4 plus the identity (width-1) rep

    key = jax.random.PRNGKey(0)
    kx, kw, kb = jax.random.split(key, 3)
    x = jax.random.normal(kx, (B, L, D), dtype=jnp.float32)
    # Deterministic synthetic Linear(hidden, hidden) params (PyTorch (out,in) layout).
    w_lin = jax.random.normal(kw, (D, D), dtype=jnp.float32) * (1.0 / jnp.sqrt(D))
    b_lin = jax.random.normal(kb, (D,), dtype=jnp.float32) * 0.01

    # tl=8 -> 3 sequence tiles per batch element: exercises the tiled/halo path.
    out = span_conv_forward(x, w_lin, b_lin, max_width, tl=8)
    out = jax.block_until_ready(out)

    ref = span_conv_reference(x, w_lin, b_lin, max_width)
    assert out.shape == (B, L, max_width, D)
    # bf16 MXU path vs f32 reference -> loosened tolerance
    assert jnp.allclose(out, ref, atol=5e-2, rtol=5e-2), "mismatch vs reference"

    print("KERNEL_OK")
</pallas_src>

<mosaic_0001>
module attributes {stable_mosaic.version = 11 : i64} {
  func.func @_span_conv_kernel(%arg0: i32, %arg1: i32, %arg2: memref<1x8x32xf32, #tpu.memory_space<vmem>>, %arg3: memref<1x8x32xf32, #tpu.memory_space<vmem>>, %arg4: memref<32x32xbf16, #tpu.memory_space<vmem>>, %arg5: memref<1x32xf32, #tpu.memory_space<vmem>>, %arg6: memref<1x8x128xf32, #tpu.memory_space<vmem>>) attributes {dimension_semantics = [#tpu.dimension_semantics<parallel>, #tpu.dimension_semantics<parallel>], iteration_bounds = array<i64: 2, 3>, scalar_prefetch = 0 : i64, scratch_operands = 0 : i64, tpu.core_type = #tpu.core_type<tc>, window_params = [{transform_indices = @transform_0, window_bounds = array<i64: 1, 8, 32>}, {transform_indices = @transform_1, window_bounds = array<i64: 1, 8, 32>}, {pipeline_mode = #tpu.pipeline_mode<synchronous>, transform_indices = @transform_2, window_bounds = array<i64: 32, 32>}, {pipeline_mode = #tpu.pipeline_mode<synchronous>, transform_indices = @transform_3, window_bounds = array<i64: 1, 32>}, {transform_indices = @transform_4, window_bounds = array<i64: 1, 8, 128>}]} {
    %c0 = arith.constant 0 : index
    %c0_0 = arith.constant 0 : index
    %c0_1 = arith.constant 0 : index
    %0 = vector.load %arg2[%c0, %c0_0, %c0_1] : memref<1x8x32xf32, #tpu.memory_space<vmem>>, vector<1x8x32xf32>
    %1 = vector.shape_cast %0 : vector<1x8x32xf32> to vector<8x32xf32>
    %c0_2 = arith.constant 0 : index
    %c0_3 = arith.constant 0 : index
    %c0_4 = arith.constant 0 : index
    %2 = vector.load %arg3[%c0_2, %c0_3, %c0_4] : memref<1x8x32xf32, #tpu.memory_space<vmem>>, vector<1x8x32xf32>
    %3 = vector.shape_cast %2 : vector<1x8x32xf32> to vector<8x32xf32>
    %4 = tpu.concatenate %1, %3 in 0 : vector<8x32xf32>, vector<8x32xf32> -> vector<16x32xf32>
    %c0_5 = arith.constant 0 : index
    %c0_6 = arith.constant 0 : index
    %5 = vector.load %arg4[%c0_5, %c0_6] : memref<32x32xbf16, #tpu.memory_space<vmem>>, vector<32x32xbf16>
    %c0_7 = arith.constant 0 : index
    %c0_8 = arith.constant 0 : index
    %6 = vector.load %arg5[%c0_7, %c0_8] : memref<1x32xf32, #tpu.memory_space<vmem>>, vector<1x32xf32>
    %7 = vector.shape_cast %6 : vector<1x32xf32> to vector<1x32xf32>
    %8 = vector.broadcast %7 : vector<1x32xf32> to vector<8x32xf32>
    %cst = arith.constant 0.000000e+00 : f32
    %9 = vector.broadcast %cst : f32 to vector<8x32xf32>
    %10 = arith.maximumf %1, %9 : vector<8x32xf32>
    %11 = arith.truncf %10 : vector<8x32xf32> to vector<8x32xbf16>
    %cst_9 = arith.constant dense<0.000000e+00> : vector<8x32xf32>
    %12 = tpu.matmul %11, %5, %cst_9 {dimension_numbers = #tpu.dot_dimension_numbers<[1], [0], [0], [1], [0, 0, 1, 1], [], []>} : vector<8x32xbf16>, vector<32x32xbf16>, vector<8x32xf32> -> vector<8x32xf32>
    %13 = arith.addf %12, %8 : vector<8x32xf32>
    %14 = vector.extract_strided_slice %4 {offsets = [1, 0], sizes = [8, 32], strides = [1, 1]} : vector<16x32xf32> to vector<8x32xf32>
    %15 = arith.addf %1, %14 : vector<8x32xf32>
    %cst_10 = arith.constant 5.000000e-01 : f32
    %16 = vector.broadcast %cst_10 : f32 to vector<8x32xf32>
    %17 = arith.mulf %15, %16 : vector<8x32xf32>
    %cst_11 = arith.constant 0.000000e+00 : f32
    %18 = vector.broadcast %cst_11 : f32 to vector<8x32xf32>
    %19 = arith.maximumf %17, %18 : vector<8x32xf32>
    %20 = arith.truncf %19 : vector<8x32xf32> to vector<8x32xbf16>
    %cst_12 = arith.constant dense<0.000000e+00> : vector<8x32xf32>
    %21 = tpu.matmul %20, %5, %cst_12 {dimension_numbers = #tpu.dot_dimension_numbers<[1], [0], [0], [1], [0, 0, 1, 1], [], []>} : vector<8x32xbf16>, vector<32x32xbf16>, vector<8x32xf32> -> vector<8x32xf32>
    %22 = arith.addf %21, %8 : vector<8x32xf32>
    %23 = vector.extract_strided_slice %4 {offsets = [2, 0], sizes = [8, 32], strides = [1, 1]} : vector<16x32xf32> to vector<8x32xf32>
    %24 = arith.addf %15, %23 : vector<8x32xf32>
    %cst_13 = arith.constant 0.333333343 : f32
    %25 = vector.broadcast %cst_13 : f32 to vector<8x32xf32>
    %26 = arith.mulf %24, %25 : vector<8x32xf32>
    %cst_14 = arith.constant 0.000000e+00 : f32
    %27 = vector.broadcast %cst_14 : f32 to vector<8x32xf32>
    %28 = arith.maximumf %26, %27 : vector<8x32xf32>
    %29 = arith.truncf %28 : vector<8x32xf32> to vector<8x32xbf16>
    %cst_15 = arith.constant dense<0.000000e+00> : vector<8x32xf32>
    %30 = tpu.matmul %29, %5, %cst_15 {dimension_numbers = #tpu.dot_dimension_numbers<[1], [0], [0], [1], [0, 0, 1, 1], [], []>} : vector<8x32xbf16>, vector<32x32xbf16>, vector<8x32xf32> -> vector<8x32xf32>
    %31 = arith.addf %30, %8 : vector<8x32xf32>
    %32 = vector.extract_strided_slice %4 {offsets = [3, 0], sizes = [8, 32], strides = [1, 1]} : vector<16x32xf32> to vector<8x32xf32>
    %33 = arith.addf %24, %32 : vector<8x32xf32>
    %cst_16 = arith.constant 2.500000e-01 : f32
    %34 = vector.broadcast %cst_16 : f32 to vector<8x32xf32>
    %35 = arith.mulf %33, %34 : vector<8x32xf32>
    %cst_17 = arith.constant 0.000000e+00 : f32
    %36 = vector.broadcast %cst_17 : f32 to vector<8x32xf32>
    %37 = arith.maximumf %35, %36 : vector<8x32xf32>
    %38 = arith.truncf %37 : vector<8x32xf32> to vector<8x32xbf16>
    %cst_18 = arith.constant dense<0.000000e+00> : vector<8x32xf32>
    %39 = tpu.matmul %38, %5, %cst_18 {dimension_numbers = #tpu.dot_dimension_numbers<[1], [0], [0], [1], [0, 0, 1, 1], [], []>} : vector<8x32xbf16>, vector<32x32xbf16>, vector<8x32xf32> -> vector<8x32xf32>
    %40 = arith.addf %39, %8 : vector<8x32xf32>
    %41 = tpu.concatenate %13, %22, %31, %40 in 1 : vector<8x32xf32>, vector<8x32xf32>, vector<8x32xf32>, vector<8x32xf32> -> vector<8x128xf32>
    %c0_19 = arith.constant 0 : index
    %c0_20 = arith.constant 0 : index
    %c0_21 = arith.constant 0 : index
    %42 = vector.load %arg6[%c0_19, %c0_20, %c0_21] : memref<1x8x128xf32, #tpu.memory_space<vmem>>, vector<1x8x128xf32>
    %43 = vector.shape_cast %42 : vector<1x8x128xf32> to vector<8x128xf32>
    %44 = vector.shape_cast %41 : vector<8x128xf32> to vector<1x8x128xf32>
    tpu.vector_store %arg6[%c0_19, %c0_20, %c0_21], %44 {strides = array<i32>} : memref<1x8x128xf32, #tpu.memory_space<vmem>>, vector<1x8x128xf32>,
    return
  }
  func.func @transform_0(%arg0: i32, %arg1: i32) -> (i32, i32, i32) {
    %c0_i32 = arith.constant 0 : i32
    %c0_i32_0 = arith.constant 0 : i32
    return %arg0, %arg1, %c0_i32 : i32, i32, i32
  }
  func.func @transform_1(%arg0: i32, %arg1: i32) -> (i32, i32, i32) {
    %c1_i32 = arith.constant 1 : i32
    %0 = arith.addi %arg1, %c1_i32 : i32
    %c1_i32_0 = arith.constant 1 : i32
    %1 = arith.muli %0, %c1_i32_0 : i32
    %c0_i32 = arith.constant 0 : i32
    %c0_i32_1 = arith.constant 0 : i32
    return %arg0, %1, %c0_i32 : i32, i32, i32
  }
  func.func @transform_2(%arg0: i32, %arg1: i32) -> (i32, i32) {
    %c0_i32 = arith.constant 0 : i32
    %c0_i32_0 = arith.constant 0 : i32
    %c0_i32_1 = arith.constant 0 : i32
    return %c0_i32, %c0_i32_0 : i32, i32
  }
  func.func @transform_3(%arg0: i32, %arg1: i32) -> (i32, i32) {
    %c0_i32 = arith.constant 0 : i32
    %c0_i32_0 = arith.constant 0 : i32
    %c0_i32_1 = arith.constant 0 : i32
    return %c0_i32, %c0_i32_0 : i32, i32
  }
  func.func @transform_4(%arg0: i32, %arg1: i32) -> (i32, i32, i32) {
    %c0_i32 = arith.constant 0 : i32
    %c0_i32_0 = arith.constant 0 : i32
    return %arg0, %arg1, %c0_i32 : i32, i32, i32
  }
}

</mosaic_0001>

<llo_original>
// kernel: tpu_custom_call.1
$region0: #{tpu_custom_call.1}
  #allocation0 [shape = 'u32[]', space=smem, size = 0x4, offset = 0x4, fixed_abs, tag = 'smem constant byte address 0x4 - core index']
  #allocation1 [shape = 'u32[144,128]{1,0:T(1,128)}', space=vmem, size = 0x12000, scoped, tag = 'internal scratch']
  %s0 = inlined_call_operand.hbm [shape: f32[2,32,32], index: 0, kind: input, shape index: {}]
  %s1 = inlined_call_operand.hbm [shape: f32[2,32,32], index: 1, kind: input, shape index: {}]
  %s2 = inlined_call_operand.hbm [shape: bf16[32,32], index: 2, kind: input, shape index: {}]
  %s3 = inlined_call_operand.vmem [shape: f32[1,32], index: 3, kind: input, shape index: {}]
  %s4 = inlined_call_operand.hbm [shape: f32[2,24,128], index: 4, kind: output, shape index: {}]
  %s5 = sld [smem:[#allocation0]]
  $region61: #{tpu_custom_call.1} parent=0
    _
  %s7 = ssub.s32 1, %s5
  %s8 = scalar_select 0, %s7, %s5
  $region1: #{tpu_custom_call.1} parent=0
    #allocation2 [shape = 'u8[8192]{0}', space=vmem, size = 0x2000, scoped, tag = 'input window, operand 0']
    #allocation3 [shape = 's32[2]{0}', space=sflag, size = 0x8, scoped, tag = 'scoped memory for tpu_custom_call.1']
    #allocation4 [shape = 's32[2]{0}', space=sflag, size = 0x8, scoped, tag = 'scoped memory for tpu_custom_call.1']
    #allocation5 [shape = 'u8[8192]{0}', space=vmem, size = 0x2000, scoped, tag = 'input window, operand 1']
    #allocation6 [shape = 's32[2]{0}', space=sflag, size = 0x8, scoped, tag = 'scoped memory for tpu_custom_call.1']
    #allocation7 [shape = 'u8[8192]{0}', space=vmem, size = 0x2000, scoped, tag = 'input window, operand 2, single buffered']
    #allocation8 [shape = 'u8[8192]{0}', space=vmem, size = 0x2000, scoped, tag = 'output window, operand 0']
    %9 = vsyncpa [#allocation3], 0
    %s10 = scalar_lea.sflag [#allocation3], 1
    %11 = vsyncpa %s10, 0
    %12 = vsyncpa [#allocation6], 0
    %s13 = scalar_lea.sflag [#allocation6], 1
    %14 = vsyncpa %s13, 0
    %15 = vsyncpa [#allocation4], 0
    %s16 = scalar_lea.sflag [#allocation4], 1
    %17 = vsyncpa %s16, 0
    loop: start=0, step=1, limit=8
    $region2: #{tpu_custom_call.1} parent=1 // loop_pre_header
      _
    $region3: #{tpu_custom_call.1} parent=1 // loop_header
      %s19 = sphi 0, %s23
      %p20 = scmp.ge.s32.totalorder %s19, 8
      %s26 = sphi 0, %s38
      %s27 = sphi 0, %s34
      %s28 = sphi 0, %s26
      %s29 = sphi 0, %s27
      %s30 = sphi 0, %s28
      %s31 = sphi 0, %s29
      %s43 = sphi 0, %s45
      %s46 = sphi 0, %s43
      %s47 = sphi 0, %s46
      %s63 = sphi 0, %s47
      %s73 = sphi 0, %s75
      %s76 = sphi 0, %s73
      %s77 = sphi 0, %s76
      %s93 = sphi 0, %s77
      %s97 = sphi 0, %s97
      %s99 = sphi 0, %s97
      %s100 = sphi 0, %s99
      %s114 = sphi 0, %s100
      %s118 = sphi 0, %s118
      %s120 = sphi 0, %s118
      %s121 = sphi 0, %s120
      %s135 = sphi 0, %s121
      %s143 = sphi 0, %s145
      %s146 = sphi 0, %s143
      %s147 = sphi 0, %s146
      %s163 = sphi 0, %s147
    $region4: #{tpu_custom_call.1} parent=1 // loop_header_branch
      %22 = sbr.rel (%p20) target = $region8
    $region5: #{tpu_custom_call.1} parent=1 // loop_body
      %s24 = ssub.s32 %s19, 1
      %s25 = ssub.s32 %s19, 2
      %s32 = sadd.s32 1, %s27
      %p33 = scmp.ge.s32.totalorder %s32, 3
      %s34 = scalar_select %p33, 0, %s32
      %s35 = sadd.s32 1, %s26
      %s36 = scalar_select %p33, %s35, %s26
      %p37 = scmp.ge.s32.totalorder %s36, 2
      %s38 = scalar_select %p37, 0, %s36
      %s39 = ssub.s32 %s26, %s38
      %s40 = ssub.s32 %s27, %s34
      %s41 = sor.u32 %s39, %s40
      %p42 = scmp.eq.s32.totalorder %s41, 0
      %s44 = sadd.s32 %s43, 1
      %s45 = scalar_select %p42, %s43, %s44
      %p48 = pneg %p42
      %p49 = scmp.eq.s32.totalorder %s19, 5
      %p50 = por %p48, %p49
      %p51 = scmp.ne.s32.totalorder %s43, %s46
      %p52 = scmp.eq.s32.totalorder %s19, 0
      %p53 = por %p51, %p52
      %p54 = scmp.ne.s32.totalorder %s43, %s46
      %p55 = scmp.eq.s32.totalorder %s24, 5
      %p56 = por %p54, %p55
      %p57 = scmp.ne.s32.totalorder %s46, %s47
      %p58 = scmp.eq.s32.totalorder %s24, 0
      %p59 = por %p57, %p58
      %p60 = scmp.ne.s32.totalorder %s46, %s47
      %p61 = scmp.eq.s32.totalorder %s25, 5
      %p62 = por %p60, %p61
      %p64 = scmp.ne.s32.totalorder %s47, %s63
      %p65 = scmp.eq.s32.totalorder %s25, 0
      %p66 = por %p64, %p65
      %s67 = sadd.s32 %s27, 1
      %s68 = sadd.s32 %s34, 1
      %s69 = ssub.s32 %s26, %s38
      %s70 = ssub.s32 %s67, %s68
      %s71 = sor.u32 %s69, %s70
      %p72 = scmp.eq.s32.totalorder %s71, 0
      %s74 = sadd.s32 %s73, 1
      %s75 = scalar_select %p72, %s73, %s74
      %p78 = pneg %p72
      %p79 = scmp.eq.s32.totalorder %s19, 5
      %p80 = por %p78, %p79
      %p81 = scmp.ne.s32.totalorder %s73, %s76
      %p82 = scmp.eq.s32.totalorder %s19, 0
      %p83 = por %p81, %p82
      %p84 = scmp.ne.s32.totalorder %s73, %s76
      %p85 = scmp.eq.s32.totalorder %s24, 5
      %p86 = por %p84, %p85
      %p87 = scmp.ne.s32.totalorder %s76, %s77
      %p88 = scmp.eq.s32.totalorder %s24, 0
      %p89 = por %p87, %p88
      %p90 = scmp.ne.s32.totalorder %s76, %s77
      %p91 = scmp.eq.s32.totalorder %s25, 5
      %p92 = por %p90, %p91
      %p94 = scmp.ne.s32.totalorder %s77, %s93
      %p95 = scmp.eq.s32.totalorder %s25, 0
      %p96 = por %p94, %p95
      %s98 = sadd.s32 %s97, 1
      %p101 = scmp.eq.s32.totalorder %s19, 5
      %p102 = scmp.ne.s32.totalorder %s97, %s99
      %p103 = scmp.eq.s32.totalorder %s19, 0
      %p104 = por %p102, %p103
      %p105 = scmp.ne.s32.totalorder %s97, %s99
      %p106 = scmp.eq.s32.totalorder %s24, 5
      %p107 = por %p105, %p106
      %p108 = scmp.ne.s32.totalorder %s99, %s100
      %p109 = scmp.eq.s32.totalorder %s24, 0
      %p110 = por %p108, %p109
      %p111 = scmp.ne.s32.totalorder %s99, %s100
      %p112 = scmp.eq.s32.totalorder %s25, 5
      %p113 = por %p111, %p112
      %p115 = scmp.ne.s32.totalorder %s100, %s114
      %p116 = scmp.eq.s32.totalorder %s25, 0
      %p117 = por %p115, %p116
      %s119 = sadd.s32 %s118, 1
      %p122 = scmp.eq.s32.totalorder %s19, 5
      %p123 = scmp.ne.s32.totalorder %s118, %s120
      %p124 = scmp.eq.s32.totalorder %s19, 0
      %p125 = por %p123, %p124
      %p126 = scmp.ne.s32.totalorder %s118, %s120
      %p127 = scmp.eq.s32.totalorder %s24, 5
      %p128 = por %p126, %p127
      %p129 = scmp.ne.s32.totalorder %s120, %s121
      %p130 = scmp.eq.s32.totalorder %s24, 0
      %p131 = por %p129, %p130
      %p132 = scmp.ne.s32.totalorder %s120, %s121
      %p133 = scmp.eq.s32.totalorder %s25, 5
      %p134 = por %p132, %p133
      %p136 = scmp.ne.s32.totalorder %s121, %s135
      %p137 = scmp.eq.s32.totalorder %s25, 0
      %p138 = por %p136, %p137
      %s139 = ssub.s32 %s26, %s38
      %s140 = ssub.s32 %s27, %s34
      %s141 = sor.u32 %s139, %s140
      %p142 = scmp.eq.s32.totalorder %s141, 0
      %s144 = sadd.s32 %s143, 1
      %s145 = scalar_select %p142, %s143, %s144
      %p148 = pneg %p142
      %p149 = scmp.eq.s32.totalorder %s19, 5
      %p150 = por %p148, %p149
      %p151 = scmp.ne.s32.totalorder %s143, %s146
      %p152 = scmp.eq.s32.totalorder %s19, 0
      %p153 = por %p151, %p152
      %p154 = scmp.ne.s32.totalorder %s143, %s146
      %p155 = scmp.eq.s32.totalorder %s24, 5
      %p156 = por %p154, %p155
      %p157 = scmp.ne.s32.totalorder %s146, %s147
      %p158 = scmp.eq.s32.totalorder %s24, 0
      %p159 = por %p157, %p158
      %p160 = scmp.ne.s32.totalorder %s146, %s147
      %p161 = scmp.eq.s32.totalorder %s25, 5
      %p162 = por %p160, %p161
      %p164 = scmp.ne.s32.totalorder %s147, %s163
      %p165 = scmp.eq.s32.totalorder %s25, 0
      %p166 = por %p164, %p165
      %p167 = scmp.le.s32.totalorder 1, %s19
      %p168 = scmp.lt.s32.totalorder %s19, 7
      %p169 = pnand %p167, %p168
      %p170 = pneg %p169
      // Predicated region
      $region9: #{tpu_custom_call.1} parent=5 // pred_check
        _
      $region10: #{tpu_custom_call.1} parent=5 // pred_check_branch
        %172 = sbr.rel (%p169) target = $region12
      $region11: #{tpu_custom_call.1} parent=5 // pred_region
        %s173 = ssub.s32 %s19, 1
        // Predicated region
        $region13: #{tpu_custom_call.1} parent=11 // pred_check
          %p174 = pneg %p110
        $region14: #{tpu_custom_call.1} parent=11 // pred_check_branch
          %176 = sbr.rel (%p174) target = $region16
        $region15: #{tpu_custom_call.1} parent=11 // pred_region
          %s178 = ssub.s32 256, 256
          %179 = vsyncadd [#allocation6], %s178
          %s180 = sshll.u32 [#allocation7], 4
          %s181 = int_to_ptr.vmem [resolvable:$true] %s180
          %186 = dma.hbm_to_vmem [thread:$0]  %s2, 256, %s181, [#allocation6], 64, 64, 4
        $region16: #{tpu_custom_call.1} parent=11 // pred_fallthru
          _
        // Predicated region
        $region17: #{tpu_custom_call.1} parent=11 // pred_check
          %p187 = pneg %p131
        $region18: #{tpu_custom_call.1} parent=11 // pred_check_branch
          %189 = sbr.rel (%p187) target = $region20
        $region19: #{tpu_custom_call.1} parent=11 // pred_region
          _
        $region20: #{tpu_custom_call.1} parent=11 // pred_fallthru
          _
      $region12: #{tpu_custom_call.1} parent=5 // pred_fallthru
        _
      %p190 = scmp.lt.s32.totalorder %s19, 6
      // Predicated region
      $region21: #{tpu_custom_call.1} parent=5 // pred_check
        %p191 = pneg %p190
      $region22: #{tpu_custom_call.1} parent=5 // pred_check_branch
        %193 = sbr.rel (%p191) target = $region24
      $region23: #{tpu_custom_call.1} parent=5 // pred_region
        // Predicated region
        $region25: #{tpu_custom_call.1} parent=23 // pred_check
          %p194 = pneg %p53
        $region26: #{tpu_custom_call.1} parent=23 // pred_check_branch
          %196 = sbr.rel (%p194) target = $region28
        $region27: #{tpu_custom_call.1} parent=23 // pred_region
          %s197 = sand.u32 %s43, 1
          %s198 = scalar_lea.sflag [#allocation3], %s197
          %s199 = sand.u32 %s43, 1
          %s200 = smul.addr %s199, 8
          %s201 = scalar_lea.vmem [#allocation2], %s200
          %s203 = ssub.s32 128, 128
          %204 = vsyncadd %s198, %s203
          %s205 = smul.addr %s26, 4
          %s206 = sadd.s32 %s27, %s205
          %s207 = smul.addr %s206, 128
          %s208 = scalar_lea.hbm %s0, %s207
          %s210 = sshll.u32 %s201, 4
          %s211 = int_to_ptr.vmem [resolvable:$true] %s210
          %213 = dma.hbm_to_vmem [thread:$0]  %s208, 128, %s211, %s198
        $region28: #{tpu_custom_call.1} parent=23 // pred_fallthru
          _
        // Predicated region
        $region29: #{tpu_custom_call.1} parent=23 // pred_check
          %p214 = pneg %p83
        $region30: #{tpu_custom_call.1} parent=23 // pred_check_branch
          %216 = sbr.rel (%p214) target = $region32
        $region31: #{tpu_custom_call.1} parent=23 // pred_region
          %s217 = sand.u32 %s19, 1
          %s218 = scalar_lea.sflag [#allocation6], %s217
          %s219 = sand.u32 %s73, 1
          %s220 = smul.addr %s219, 8
          %s221 = scalar_lea.vmem [#allocation5], %s220
          %s222 = sadd.s32 %s27, 1
          %s224 = ssub.s32 128, 128
          %225 = vsyncadd %s218, %s224
          %s226 = smul.addr %s26, 4
          %s227 = sadd.s32 %s222, %s226
          %s228 = smul.addr %s227, 128
          %s229 = scalar_lea.hbm %s1, %s228
          %s231 = sshll.u32 %s221, 4
          %s232 = int_to_ptr.vmem [resolvable:$true] %s231
          %234 = dma.hbm_to_vmem [thread:$0]  %s229, 128, %s232, %s218
        $region32: #{tpu_custom_call.1} parent=23 // pred_fallthru
          _
      $region24: #{tpu_custom_call.1} parent=5 // pred_fallthru
        _
      %p235 = scmp.le.s32.totalorder 1, %s19
      %p236 = scmp.lt.s32.totalorder %s19, 7
      %p237 = pnand %p235, %p236
      %p238 = pneg %p237
      // Predicated region
      $region33: #{tpu_custom_call.1} parent=5 // pred_check
        _
      $region34: #{tpu_custom_call.1} parent=5 // pred_check_branch
        %240 = sbr.rel (%p237) target = $region36
      $region35: #{tpu_custom_call.1} parent=5 // pred_region
        %s241 = ssub.s32 %s19, 1
        %s242 = sand.u32 %s46, 1
        %s243 = scalar_lea.sflag [#allocation3], %s242
        %s244 = sand.u32 %s46, 1
        %s245 = smul.addr %s244, 8
        %s246 = scalar_lea.vmem [#allocation2], %s245
        // Predicated region
        $region37: #{tpu_custom_call.1} parent=35 // pred_check
          %p247 = pneg %p59
        $region38: #{tpu_custom_call.1} parent=35 // pred_check_branch
          %249 = sbr.rel (%p247) target = $region40
        $region39: #{tpu_custom_call.1} parent=35 // pred_region
          %250 = dma.done %s243, 128
        $region40: #{tpu_custom_call.1} parent=35 // pred_fallthru
          _
        %s251 = sand.u32 %s24, 1
        %s252 = scalar_lea.sflag [#allocation6], %s251
        %s253 = sand.u32 %s76, 1
        %s254 = smul.addr %s253, 8
        %s255 = scalar_lea.vmem [#allocation5], %s254
        // Predicated region
        $region41: #{tpu_custom_call.1} parent=35 // pred_check
          %p256 = pneg %p89
        $region42: #{tpu_custom_call.1} parent=35 // pred_check_branch
          %258 = sbr.rel (%p256) target = $region44
        $region43: #{tpu_custom_call.1} parent=35 // pred_region
          %259 = dma.done %s252, 128
        $region44: #{tpu_custom_call.1} parent=35 // pred_fallthru
          _
        // Predicated region
        $region45: #{tpu_custom_call.1} parent=35 // pred_check
          %p260 = pneg %p110
        $region46: #{tpu_custom_call.1} parent=35 // pred_check_branch
          %262 = sbr.rel (%p260) target = $region48
        $region47: #{tpu_custom_call.1} parent=35 // pred_region
          %263 = dma.done [#allocation6], 256
        $region48: #{tpu_custom_call.1} parent=35 // pred_fallthru
          _
        %s264 = sand.u32 %s46, 1
        %s265 = scalar_lea.sflag [#allocation3], %s264
        %s266 = sand.u32 %s46, 1
        %s267 = smul.addr %s266, 8
        %s268 = scalar_lea.vmem [#allocation2], %s267
        %p269 = pneg %p59
        %p270 = pneg %p56
        %s271 = sand.u32 %s24, 1
        %s272 = scalar_lea.sflag [#allocation6], %s271
        %s273 = sand.u32 %s76, 1
        %s274 = smul.addr %s273, 8
        %s275 = scalar_lea.vmem [#allocation5], %s274
        %p276 = pneg %p89
        %p277 = pneg %p86
        %p278 = pneg %p110
        %p279 = pneg %p107
        %p280 = pneg %p131
        %p281 = pneg %p128
        %p282 = pneg %p159
        %p283 = pneg %p156
        %s284 = sand.u32 %s146, 1
        %s285 = scalar_lea.sflag [#allocation4], %s284
        %s286 = sand.u32 %s146, 1
        %s287 = smul.addr %s286, 8
        %s288 = scalar_lea.vmem [#allocation8], %s287
        %s289 = sadd.s32 %s29, 1
        %v291 = vld [vmem:[%s246] sm:$0xff]
        %v292 = vld [vmem:[%s255] sm:$0xff]
        %v293 = vld [vmem:[#allocation7] sm:$0xf]
        %v294 = vld [vmem:[#allocation7 + $0x4] sm:$0xf]
        %v295 = vld [vmem:[#allocation7 + $0x8] sm:$0xf]
        %v296 = vld [vmem:[#allocation7 + $0xc] sm:$0xf]
        %v297 = vld [vmem:[%s3] sm:$0x1]
        %v299 = vlaneseq
        %v300 = vshrl.u32 %v299, 7
        %v301 = vsub.s32 0, %v300
        %v302 = vrot.slane %v297, %v301
        %v304 = vmax.f32 %v291, 0.0
        %v305 = vpack.c.bf16 %v304, %v304
        %v310 = vunpack.c.l.b16 %v293
        %v311 = vunpack.c.l.b16 %v294
        %v312 = vunpack.c.l.b16 %v295
        %v313 = vunpack.c.l.b16 %v296
        %v314 = vpack.c.b16 %v311, %v310
        %v315 = vpack.c.b16 %v313, %v312
        %vm318 = vcmask 261120
        %v320 = vsel %vm318, %v305, 0
        %322 = vmatprep.subr.bf16.mxu0 0
        %323 = vmatpush1.bf16.msra.mxu0 %v314
        %324 = vmatprep.subr.bf16.mxu0 0
        %325 = vmatpush1.bf16.msra.mxu0 %v315
        %326 = vmatprep.subr.bf16.mxu0 0
        %327 = vmatpush1.bf16.msra.mxu0 0
        %328 = vmatprep.subr.bf16.mxu0 0
        %329 = vmatpush1.bf16.msra.mxu0 0
        %330 = vmatprep.subr.bf16.mxu0 0
        %331 = vmatpush1.bf16.msra.mxu0 0
        %332 = vmatprep.subr.bf16.mxu0 0
        %333 = vmatpush1.bf16.msra.mxu0 0
        %334 = vmatprep.subr.bf16.mxu0 0
        %335 = vmatpush1.bf16.msra.mxu0 0
        %336 = vmatprep.subr.bf16.mxu0 0
        %337 = vmatpush1.bf16.msra.mxu0 0
        %338 = vmatprep.subr.bf16.mxu0 0
        %339 = vmatpush1.bf16.msra.mxu0 0
        %340 = vmatprep.subr.bf16.mxu0 0
        %341 = vmatpush1.bf16.msra.mxu0 0
        %342 = vmatprep.subr.bf16.mxu0 0
        %343 = vmatpush1.bf16.msra.mxu0 0
        %344 = vmatprep.subr.bf16.mxu0 0
        %345 = vmatpush1.bf16.msra.mxu0 0
        %346 = vmatprep.subr.bf16.mxu0 0
        %347 = vmatpush1.bf16.msra.mxu0 0
        %348 = vmatprep.subr.bf16.mxu0 0
        %349 = vmatpush1.bf16.msra.mxu0 0
        %350 = vmatprep.subr.bf16.mxu0 0
        %351 = vmatpush1.bf16.msra.mxu0 0
        %352 = vmatprep.subr.bf16.mxu0 0
        %353 = vmatpush1.bf16.msra.mxu0 0
        %354 = vmatprep.mubr.bf16.mxu0 0
        %355 = vmatmul.mubr.bf16.gmra.mrb[0].mxu0 %v320
        %v356 = vpop.f32.mrb[0].mxu0
        %v357 = vadd.f32 %v302, %v356
        %v358 = vpop.f32.mrb[0].mxu0
        %v359 = vpop.f32.mrb[0].mxu0
        %v360 = vpop.f32.mrb[0].mxu0
        %361 = vdwg.mxu0
        %vm364 = vcmask 1046528
        %v365 = vrot.slane %v291, 1
        %v366 = vrot.slane %v292, 1
        %v367 = vsel %vm364, %v365, %v366
        %v369 = vadd.f32 %v291, %v367
        %v370 = vmul.f32 %v369, 0.5
        %v371 = vmax.f32 %v370, 0.0
        %v372 = vpack.c.bf16 %v371, %v371
        %v374 = vsel %vm318, %v372, 0
        %376 = vmatprep.subr.bf16.mxu0 0
        %377 = vmatpush1.bf16.msra.mxu0 %v314
        %378 = vmatprep.subr.bf16.mxu0 0
        %379 = vmatpush1.bf16.msra.mxu0 %v315
        %380 = vmatprep.subr.bf16.mxu0 0
        %381 = vmatpush1.bf16.msra.mxu0 0
        %382 = vmatprep.subr.bf16.mxu0 0
        %383 = vmatpush1.bf16.msra.mxu0 0
        %384 = vmatprep.subr.bf16.mxu0 0
        %385 = vmatpush1.bf16.msra.mxu0 0
        %386 = vmatprep.subr.bf16.mxu0 0
        %387 = vmatpush1.bf16.msra.mxu0 0
        %388 = vmatprep.subr.bf16.mxu0 0
        %389 = vmatpush1.bf16.msra.mxu0 0
        %390 = vmatprep.subr.bf16.mxu0 0
        %391 = vmatpush1.bf16.msra.mxu0 0
        %392 = vmatprep.subr.bf16.mxu0 0
        %393 = vmatpush1.bf16.msra.mxu0 0
        %394 = vmatprep.subr.bf16.mxu0 0
        %395 = vmatpush1.bf16.msra.mxu0 0
        %396 = vmatprep.subr.bf16.mxu0 0
        %397 = vmatpush1.bf16.msra.mxu0 0
        %398 = vmatprep.subr.bf16.mxu0 0
        %399 = vmatpush1.bf16.msra.mxu0 0
        %400 = vmatprep.subr.bf16.mxu0 0
        %401 = vmatpush1.bf16.msra.mxu0 0
        %402 = vmatprep.subr.bf16.mxu0 0
        %403 = vmatpush1.bf16.msra.mxu0 0
        %404 = vmatprep.subr.bf16.mxu0 0
        %405 = vmatpush1.bf16.msra.mxu0 0
        %406 = vmatprep.subr.bf16.mxu0 0
        %407 = vmatpush1.bf16.msra.mxu0 0
        %408 = vmatprep.mubr.bf16.mxu0 0
        %409 = vmatmul.mubr.bf16.gmra.mrb[0].mxu0 %v374
        %v410 = vpop.f32.mrb[0].mxu0
        %v411 = vadd.f32 %v302, %v410
        %v412 = vpop.f32.mrb[0].mxu0
        %v413 = vpop.f32.mrb[0].mxu0
        %v414 = vpop.f32.mrb[0].mxu0
        %415 = vdwg.mxu0
        %vm416 = vcmask 1045504
        %v417 = vrot.slane %v291, 2
        %v418 = vrot.slane %v292, 2
        %v419 = vsel %vm416, %v417, %v418
        %v421 = vadd.f32 %v369, %v419
        %v422 = vmul.f32 %v421, 0.33333334
        %v423 = vmax.f32 %v422, 0.0
        %v424 = vpack.c.bf16 %v423, %v423
        %v426 = vsel %vm318, %v424, 0
        %428 = vmatprep.subr.bf16.mxu0 0
        %429 = vmatpush1.bf16.msra.mxu0 %v314
        %430 = vmatprep.subr.bf16.mxu0 0
        %431 = vmatpush1.bf16.msra.mxu0 %v315
        %432 = vmatprep.subr.bf16.mxu0 0
        %433 = vmatpush1.bf16.msra.mxu0 0
        %434 = vmatprep.subr.bf16.mxu0 0
        %435 = vmatpush1.bf16.msra.mxu0 0
        %436 = vmatprep.subr.bf16.mxu0 0
        %437 = vmatpush1.bf16.msra.mxu0 0
        %438 = vmatprep.subr.bf16.mxu0 0
        %439 = vmatpush1.bf16.msra.mxu0 0
        %440 = vmatprep.subr.bf16.mxu0 0
        %441 = vmatpush1.bf16.msra.mxu0 0
        %442 = vmatprep.subr.bf16.mxu0 0
        %443 = vmatpush1.bf16.msra.mxu0 0
        %444 = vmatprep.subr.bf16.mxu0 0
        %445 = vmatpush1.bf16.msra.mxu0 0
        %446 = vmatprep.subr.bf16.mxu0 0
        %447 = vmatpush1.bf16.msra.mxu0 0
        %448 = vmatprep.subr.bf16.mxu0 0
        %449 = vmatpush1.bf16.msra.mxu0 0
        %450 = vmatprep.subr.bf16.mxu0 0
        %451 = vmatpush1.bf16.msra.mxu0 0
        %452 = vmatprep.subr.bf16.mxu0 0
        %453 = vmatpush1.bf16.msra.mxu0 0
        %454 = vmatprep.subr.bf16.mxu0 0
        %455 = vmatpush1.bf16.msra.mxu0 0
        %456 = vmatprep.subr.bf16.mxu0 0
        %457 = vmatpush1.bf16.msra.mxu0 0
        %458 = vmatprep.subr.bf16.mxu0 0
        %459 = vmatpush1.bf16.msra.mxu0 0
        %460 = vmatprep.mubr.bf16.mxu0 0
        %461 = vmatmul.mubr.bf16.gmra.mrb[0].mxu0 %v426
        %v462 = vpop.f32.mrb[0].mxu0
        %v463 = vadd.f32 %v302, %v462
        %v464 = vpop.f32.mrb[0].mxu0
        %v465 = vpop.f32.mrb[0].mxu0
        %v466 = vpop.f32.mrb[0].mxu0
        %467 = vdwg.mxu0
        %vm468 = vcmask 1044480
        %v469 = vrot.slane %v291, 3
        %v470 = vrot.slane %v292, 3
        %v471 = vsel %vm468, %v469, %v470
        %v473 = vadd.f32 %v421, %v471
        %v474 = vmul.f32 %v473, 0.25
        %v475 = vmax.f32 %v474, 0.0
        %v476 = vpack.c.bf16 %v475, %v475
        %v478 = vsel %vm318, %v476, 0
        %480 = vmatprep.subr.bf16.mxu0 0
        %481 = vmatpush1.bf16.msra.mxu0 %v314
        %482 = vmatprep.subr.bf16.mxu0 0
        %483 = vmatpush1.bf16.msra.mxu0 %v315
        %484 = vmatprep.subr.bf16.mxu0 0
        %485 = vmatpush1.bf16.msra.mxu0 0
        %486 = vmatprep.subr.bf16.mxu0 0
        %487 = vmatpush1.bf16.msra.mxu0 0
        %488 = vmatprep.subr.bf16.mxu0 0
        %489 = vmatpush1.bf16.msra.mxu0 0
        %490 = vmatprep.subr.bf16.mxu0 0
        %491 = vmatpush1.bf16.msra.mxu0 0
        %492 = vmatprep.subr.bf16.mxu0 0
        %493 = vmatpush1.bf16.msra.mxu0 0
        %494 = vmatprep.subr.bf16.mxu0 0
        %495 = vmatpush1.bf16.msra.mxu0 0
        %496 = vmatprep.subr.bf16.mxu0 0
        %497 = vmatpush1.bf16.msra.mxu0 0
        %498 = vmatprep.subr.bf16.mxu0 0
        %499 = vmatpush1.bf16.msra.mxu0 0
        %500 = vmatprep.subr.bf16.mxu0 0
        %501 = vmatpush1.bf16.msra.mxu0 0
        %502 = vmatprep.subr.bf16.mxu0 0
        %503 = vmatpush1.bf16.msra.mxu0 0
        %504 = vmatprep.subr.bf16.mxu0 0
        %505 = vmatpush1.bf16.msra.mxu0 0
        %506 = vmatprep.subr.bf16.mxu0 0
        %507 = vmatpush1.bf16.msra.mxu0 0
        %508 = vmatprep.subr.bf16.mxu0 0
        %509 = vmatpush1.bf16.msra.mxu0 0
        %510 = vmatprep.subr.bf16.mxu0 0
        %511 = vmatpush1.bf16.msra.mxu0 0
        %512 = vmatprep.mubr.bf16.mxu0 0
        %513 = vmatmul.mubr.bf16.gmra.mrb[0].mxu0 %v478
        %v514 = vpop.f32.mrb[0].mxu0
        %v515 = vadd.f32 %v302, %v514
        %v516 = vpop.f32.mrb[0].mxu0
        %v517 = vpop.f32.mrb[0].mxu0
        %v518 = vpop.f32.mrb[0].mxu0
        %519 = vdwg.mxu0
        %521 = vrot.lane.b32.xlu0 %v411, 32
        %v522 = vpop.permute.xlu0 %521
        %525 = vrot.lane.b32.xlu0 %v463, 64
        %v526 = vpop.permute.xlu0 %525
        %529 = vrot.lane.b32.xlu0 %v515, 96
        %v530 = vpop.permute.xlu0 %529
        %v532 = vsel %vm318, %v357, %v522
        %vm533 = vcmask 523264
        %v534 = vsel %vm533, %v532, %v526
        %vm535 = vcmask 785408
        %v536 = vsel %vm535, %v534, %v530
        %537 = vst [vmem:[%s288] sm:$0xff] %v536
        %s538 = sand.u32 %s146, 1
        %s539 = scalar_lea.sflag [#allocation4], %s538
        %s540 = sand.u32 %s146, 1
        %s541 = smul.addr %s540, 8
        %s542 = scalar_lea.vmem [#allocation8], %s541
        // Predicated region
        $region49: #{tpu_custom_call.1} parent=35 // pred_check
          %p543 = pneg %p156
        $region50: #{tpu_custom_call.1} parent=35 // pred_check_branch
          %545 = sbr.rel (%p543) target = $region52
        $region51: #{tpu_custom_call.1} parent=35 // pred_region
          %s547 = ssub.s32 128, 128
          %548 = vsyncadd %s539, %s547
          %s549 = smul.addr %s28, 3
          %s550 = sadd.s32 %s29, %s549
          %s551 = smul.addr %s550, 128
          %s552 = scalar_lea.hbm %s4, %s551
          %s554 = sshll.u32 %s542, 4
          %s555 = int_to_ptr.vmem [resolvable:$true] %s554
          %557 = dma.vmem_to_hbm [thread:$0]  %s555, 128, %s552, %s539
        $region52: #{tpu_custom_call.1} parent=35 // pred_fallthru
          _
      $region36: #{tpu_custom_call.1} parent=5 // pred_fallthru
        _
      %p558 = scmp.le.s32.totalorder 2, %s19
      // Predicated region
      $region53: #{tpu_custom_call.1} parent=5 // pred_check
        %p559 = pneg %p558
      $region54: #{tpu_custom_call.1} parent=5 // pred_check_branch
        %561 = sbr.rel (%p559) target = $region56
      $region55: #{tpu_custom_call.1} parent=5 // pred_region
        %s562 = ssub.s32 %s19, 2
        // Predicated region
        $region57: #{tpu_custom_call.1} parent=55 // pred_check
          %p563 = pneg %p162
        $region58: #{tpu_custom_call.1} parent=55 // pred_check_branch
          %565 = sbr.rel (%p563) target = $region60
        $region59: #{tpu_custom_call.1} parent=55 // pred_region
          %s566 = sand.u32 %s147, 1
          %s567 = scalar_lea.sflag [#allocation4], %s566
          %s568 = sand.u32 %s147, 1
          %s569 = smul.addr %s568, 8
          %s570 = scalar_lea.vmem [#allocation8], %s569
          %571 = dma.done %s567, 128
        $region60: #{tpu_custom_call.1} parent=55 // pred_fallthru
          _
      $region56: #{tpu_custom_call.1} parent=5 // pred_fallthru
        _
    $region6: #{tpu_custom_call.1} parent=1 // loop_footer
      %s23 = sadd.s32 1, %s19
    $region7: #{tpu_custom_call.1} parent=1 // loop_footer_branch
      %18 = sbr.rel target = $region3
    $region8: #{tpu_custom_call.1} parent=1 // loop_exit
      _
    %572 = vsyncpa [#allocation3], 1
    %s573 = scalar_lea.sflag [#allocation3], 1
    %574 = vsyncpa %s573, 1
    %575 = vsyncpa [#allocation6], 1
    %s576 = scalar_lea.sflag [#allocation6], 1
    %577 = vsyncpa %s576, 1
    %578 = vsyncpa [#allocation4], 1
    %s579 = scalar_lea.sflag [#allocation4], 1
    %580 = vsyncpa %s579, 1

</llo_original>
